<compile_context>
chip_gen: v7x
topology: tpu7x:2x2x1
jax: 0.10.0
libtpu: 0.0.40
codegen_flags: <defaults>
</compile_context>

<pallas_src>
import functools
import math

import jax
import jax.numpy as jnp
from jax.experimental import pallas as pl
from jax.experimental.pallas import tpu as pltpu

# Safe on every generation (v5e scoped default is only 16 MiB; v7x physical
# VMEM is 64 MiB).  Tiles below are sized well under this budget.
VMEM_LIMIT = 32 * 1024 * 1024


def _pick_tile(dim, cap, align):
    """Largest multiple of `align` that divides `dim` and is <= cap, else dim."""
    best = None
    t = align
    while t <= min(dim, cap):
        if dim % t == 0:
            best = t
        t += align
    return best if best is not None else dim


# ---------------------------------------------------------------------------
# Kernel 1: TransformerEmbedding (one-hot MXU gather + positional encoding)
# ---------------------------------------------------------------------------

def _embedding_kernel(ids_ref,   # VMEM (TS, 1) int32
                      emb_ref,   # VMEM (V, D)  f32  (whole table, small vocab)
                      enc_ref,   # VMEM (TS, D) f32  positional-encoding tile
                      out_ref,   # VMEM (TS, D) f32
                      *, vocab):
    ids = ids_ref[...]                                            # (TS, 1)
    iota = jax.lax.broadcasted_iota(jnp.int32, (ids.shape[0], vocab), 1)
    onehot = (iota == ids).astype(jnp.float32)                    # (TS, V)
    gathered = jnp.dot(onehot, emb_ref[...],
                       preferred_element_type=jnp.float32)        # (TS, D)
    out_ref[...] = (gathered + enc_ref[...]).astype(out_ref.dtype)


def transformer_embedding(ids, emb_table, encoding):
    """out[b, s, :] = emb_table[ids[b, s], :] + encoding[s, :]"""
    B, S = ids.shape
    V, D = emb_table.shape
    assert encoding.shape[0] >= S
    ts = _pick_tile(S, 256, 8)
    grid = (S // ts, B)        # seq outer, batch inner (encoding tile reused)
    ids3 = ids.astype(jnp.int32).reshape(B, S, 1)

    return pl.pallas_call(
        functools.partial(_embedding_kernel, vocab=V),
        out_shape=jax.ShapeDtypeStruct((B, S, D), jnp.float32),
        grid=grid,
        in_specs=[
            pl.BlockSpec((None, ts, 1), lambda s, b: (b, s, 0)),
            pl.BlockSpec((V, D), lambda s, b: (0, 0)),
            pl.BlockSpec((ts, D), lambda s, b: (s, 0)),
        ],
        out_specs=pl.BlockSpec((None, ts, D), lambda s, b: (b, s, 0)),
        compiler_params=pltpu.CompilerParams(
            dimension_semantics=("parallel", "parallel"),
            vmem_limit_bytes=VMEM_LIMIT),
    )(ids3, emb_table, encoding[:S])


# ---------------------------------------------------------------------------
# Kernel 2: tiled Linear  (x @ W + b, optional fused ReLU)
# ---------------------------------------------------------------------------

def _linear_kernel(x_ref, w_ref, b_ref, o_ref, acc_ref, *, relu, n_k):
    k = pl.program_id(2)

    @pl.when(k == 0)
    def _():
        acc_ref[...] = jnp.zeros_like(acc_ref)

    acc_ref[...] += jnp.dot(x_ref[...], w_ref[...],
                            preferred_element_type=jnp.float32)

    @pl.when(k == n_k - 1)
    def _():
        y = acc_ref[...] + b_ref[...]
        if relu:
            y = jnp.maximum(y, 0.0)
        o_ref[...] = y.astype(o_ref.dtype)


def linear(x2d, w, b, relu=False):
    M, K = x2d.shape
    K2, N = w.shape
    assert K == K2
    tm = _pick_tile(M, 256, 8)
    tn = _pick_tile(N, 512, 128)
    tk = _pick_tile(K, 512, 128)
    grid = (M // tm, N // tn, K // tk)
    kernel = functools.partial(_linear_kernel, relu=relu, n_k=grid[2])
    return pl.pallas_call(
        kernel,
        out_shape=jax.ShapeDtypeStruct((M, N), x2d.dtype),
        grid=grid,
        in_specs=[
            pl.BlockSpec((tm, tk), lambda i, j, k: (i, k)),
            pl.BlockSpec((tk, tn), lambda i, j, k: (k, j)),
            pl.BlockSpec((1, tn), lambda i, j, k: (0, j)),
        ],
        out_specs=pl.BlockSpec((tm, tn), lambda i, j, k: (i, j)),
        scratch_shapes=[pltpu.VMEM((tm, tn), jnp.float32)],
        compiler_params=pltpu.CompilerParams(
            dimension_semantics=("parallel", "parallel", "arbitrary"),
            vmem_limit_bytes=VMEM_LIMIT),
    )(x2d, w, b.reshape(1, N))


# ---------------------------------------------------------------------------
# Kernel 3: tiled Linear fused with residual add + LayerNorm (gamma=1, beta=0)
# ---------------------------------------------------------------------------

def _linear_res_ln_kernel(x_ref, w_ref, b_ref, res_ref, o_ref, acc_ref,
                          *, eps, n_k):
    k = pl.program_id(2)

    @pl.when(k == 0)
    def _():
        acc_ref[...] = jnp.zeros_like(acc_ref)

    acc_ref[...] += jnp.dot(x_ref[...], w_ref[...],
                            preferred_element_type=jnp.float32)

    @pl.when(k == n_k - 1)
    def _():
        y = acc_ref[...] + b_ref[...] + res_ref[...]
        mean = jnp.mean(y, axis=-1, keepdims=True)
        var = jnp.mean((y - mean) ** 2, axis=-1, keepdims=True)
        o_ref[...] = ((y - mean) * jax.lax.rsqrt(var + eps)).astype(o_ref.dtype)


def linear_residual_layernorm(x2d, w, b, res2d, eps=1e-12):
    """LayerNorm(x2d @ w + b + res2d)  (torch forward skips gamma/beta)."""
    M, K = x2d.shape
    K2, N = w.shape
    assert K == K2 and res2d.shape == (M, N)
    tm = _pick_tile(M, 256, 8)
    tn = N                                 # full rows needed for LayerNorm
    tk = _pick_tile(K, 512, 128)
    grid = (M // tm, 1, K // tk)
    kernel = functools.partial(_linear_res_ln_kernel, eps=eps, n_k=grid[2])
    return pl.pallas_call(
        kernel,
        out_shape=jax.ShapeDtypeStruct((M, N), x2d.dtype),
        grid=grid,
        in_specs=[
            pl.BlockSpec((tm, tk), lambda i, j, k: (i, k)),
            pl.BlockSpec((tk, tn), lambda i, j, k: (k, j)),
            pl.BlockSpec((1, tn), lambda i, j, k: (0, j)),
            pl.BlockSpec((tm, tn), lambda i, j, k: (i, 0)),
        ],
        out_specs=pl.BlockSpec((tm, tn), lambda i, j, k: (i, j)),
        scratch_shapes=[pltpu.VMEM((tm, tn), jnp.float32)],
        compiler_params=pltpu.CompilerParams(
            dimension_semantics=("parallel", "parallel", "arbitrary"),
            vmem_limit_bytes=VMEM_LIMIT),
    )(x2d, w, b.reshape(1, N), res2d)


# ---------------------------------------------------------------------------
# Kernel 4: fused scaled-dot-product attention (all heads per batch step)
# ---------------------------------------------------------------------------

def _attention_kernel(q_ref, k_ref, v_ref, m_ref, o_ref, *, scale, n_heads, dh):
    q = q_ref[...]          # (Sq, D)
    k = k_ref[...]          # (Sk, D)
    v = v_ref[...]          # (Sk, D)
    mask = m_ref[...]       # (Sq, Sk) float, 1 = keep
    ctxs = []
    for h in range(n_heads):            # heads live in the lane dimension
        lo, hi = h * dh, (h + 1) * dh
        qh, kh, vh = q[:, lo:hi], k[:, lo:hi], v[:, lo:hi]
        s = jax.lax.dot_general(qh, kh, (((1,), (1,)), ((), ())),
                                preferred_element_type=jnp.float32) * scale
        s = jnp.where(mask == 0.0, -1e9, s)
        s_max = jnp.max(s, axis=-1, keepdims=True)
        p = jnp.exp(s - s_max)
        denom = jnp.sum(p, axis=-1, keepdims=True)
        ctx = jnp.dot(p, vh, preferred_element_type=jnp.float32)
        ctx = ctx * pl.reciprocal(denom, approx=False)   # normalize the small tile
        ctxs.append(ctx)
    o_ref[...] = jnp.concatenate(ctxs, axis=-1).astype(o_ref.dtype)


def fused_attention(q, k, v, mask, scale, n_heads):
    """q: (B, Sq, D), k/v: (B, Sk, D), mask: (B, Sq, Sk) float (1 = keep)."""
    B, Sq, D = q.shape
    Sk = k.shape[1]
    dh = D // n_heads
    kernel = functools.partial(_attention_kernel, scale=scale,
                               n_heads=n_heads, dh=dh)
    return pl.pallas_call(
        kernel,
        out_shape=jax.ShapeDtypeStruct((B, Sq, D), q.dtype),
        grid=(B,),
        in_specs=[
            pl.BlockSpec((None, Sq, D), lambda b: (b, 0, 0)),
            pl.BlockSpec((None, Sk, D), lambda b: (b, 0, 0)),
            pl.BlockSpec((None, Sk, D), lambda b: (b, 0, 0)),
            pl.BlockSpec((None, Sq, Sk), lambda b: (b, 0, 0)),
        ],
        out_specs=pl.BlockSpec((None, Sq, D), lambda b: (b, 0, 0)),
        compiler_params=pltpu.CompilerParams(
            dimension_semantics=("parallel",),
            vmem_limit_bytes=VMEM_LIMIT),
    )(q, k, v, mask)


# ---------------------------------------------------------------------------
# Model glue (layout plumbing in plain JAX; math runs in the kernels above)
# ---------------------------------------------------------------------------

def mha_block(p, q_in, kv_in, mask3, residual, n_heads, d_k, self_attn):
    """MultiHeadAttention + dropout(identity) + LayerNorm(out + residual)."""
    B, Sq, D = q_in.shape
    Sk = kv_in.shape[1]
    if self_attn:   # fused QKV projection: one pass over the activations
        w_qkv = jnp.concatenate([p["wq"], p["wk"], p["wv"]], axis=1)
        b_qkv = jnp.concatenate([p["bq"], p["bk"], p["bv"]])
        qkv = linear(q_in.reshape(B * Sq, D), w_qkv, b_qkv)
        q, k, v = qkv[:, :D], qkv[:, D:2 * D], qkv[:, 2 * D:]
    else:           # cross-attention: fused KV projection on the encoder side
        q = linear(q_in.reshape(B * Sq, D), p["wq"], p["bq"])
        w_kv = jnp.concatenate([p["wk"], p["wv"]], axis=1)
        b_kv = jnp.concatenate([p["bk"], p["bv"]])
        kv = linear(kv_in.reshape(B * Sk, D), w_kv, b_kv)
        k, v = kv[:, :D], kv[:, D:]
    scale = 1.0 / math.sqrt(d_k / n_heads)
    ctx = fused_attention(q.reshape(B, Sq, D), k.reshape(B, Sk, D),
                          v.reshape(B, Sk, D), mask3, scale, n_heads)
    # W_o projection fused with residual add + LayerNorm
    out = linear_residual_layernorm(ctx.reshape(B * Sq, D), p["wo"], p["bo"],
                                    residual.reshape(B * Sq, D))
    return out.reshape(B, Sq, D)


def ffn_block(p, x):
    """PositionwiseFeedForward + dropout(identity) + LayerNorm(out + x)."""
    B, S, D = x.shape
    x2 = x.reshape(B * S, D)
    h = linear(x2, p["w1"], p["b1"], relu=True)
    out = linear_residual_layernorm(h, p["w2"], p["b2"], x2)
    return out.reshape(B, S, D)


def encoder_layer(p, x, src_mask3, n_heads, d_k):
    x = mha_block(p["attn"], x, x, src_mask3, x, n_heads, d_k, self_attn=True)
    x = ffn_block(p["ffn"], x)
    return x


def decoder_layer(p, dec, enc, trg_mask3, src_mask3, n_heads, d_k):
    x = mha_block(p["self_attn"], dec, dec, trg_mask3, dec, n_heads, d_k,
                  self_attn=True)
    x = mha_block(p["cross_attn"], x, enc, src_mask3, x, n_heads, d_k,
                  self_attn=False)
    x = ffn_block(p["ffn"], x)
    return x


# Boolean 4-D masks (reference semantics) --------------------------------------

def make_src_mask(src, src_pad_idx):
    return (src != src_pad_idx)[:, None, None, :]


def make_trg_mask(trg, trg_pad_idx):
    St = trg.shape[1]
    pad_mask = (trg != trg_pad_idx)[:, None, :, None]
    sub_mask = jnp.tril(jnp.ones((St, St), dtype=bool))
    return pad_mask & sub_mask[None, None, :, :]


# Compact float (B, Sq, Sk) masks for the kernels (no n_heads duplication) -----
# TODO(synk): scalar-prefetch per-row valid lengths and build the pad/causal
# mask in-kernel with broadcasted_iota to remove the mask DMA entirely.

def make_kernel_masks(src, trg, src_pad_idx, trg_pad_idx):
    B, Ss = src.shape
    St = trg.shape[1]
    src_keep = (src != src_pad_idx).astype(jnp.float32)                  # (B, Ss)
    src_mask_enc = jnp.broadcast_to(src_keep[:, None, :], (B, Ss, Ss))
    src_mask_dec = jnp.broadcast_to(src_keep[:, None, :], (B, St, Ss))
    trg_pad = (trg != trg_pad_idx).astype(jnp.float32)[:, :, None]       # (B, St, 1)
    causal = jnp.tril(jnp.ones((St, St), jnp.float32))[None]
    trg_mask = trg_pad * causal                                          # (B, St, St)
    return src_mask_enc, src_mask_dec, trg_mask


def transformer_forward(params, src, trg, *, src_pad_idx, trg_pad_idx,
                        n_heads, d_k):
    src_mask_enc, src_mask_dec, trg_mask = make_kernel_masks(
        src, trg, src_pad_idx, trg_pad_idx)
    # encoder
    x = transformer_embedding(src, params["enc_emb"], params["enc_pe"])
    for lp in params["enc_layers"]:
        x = encoder_layer(lp, x, src_mask_enc, n_heads, d_k)
    enc_src = x
    # decoder
    y = transformer_embedding(trg, params["dec_emb"], params["dec_pe"])
    for lp in params["dec_layers"]:
        y = decoder_layer(lp, y, enc_src, trg_mask, src_mask_dec, n_heads, d_k)
    B, St, D = y.shape
    logits = linear(y.reshape(B * St, D), params["w_out"], params["b_out"])
    return logits.reshape(B, St, -1)


# ---------------------------------------------------------------------------
# Parameter construction (matches the torch module's structure)
# ---------------------------------------------------------------------------

def make_sinusoid_encoding(max_len, d_model):
    pos = jnp.arange(max_len, dtype=jnp.float32)[:, None]
    two_i = jnp.arange(0, d_model, 2, dtype=jnp.float32)
    angle = pos / (10000.0 ** (two_i / d_model))
    enc = jnp.zeros((max_len, d_model), dtype=jnp.float32)
    enc = enc.at[:, 0::2].set(jnp.sin(angle))
    enc = enc.at[:, 1::2].set(jnp.cos(angle))
    return enc


def _init_linear(kg, d_in, d_out):
    w = 0.1 * jax.random.normal(kg(), (d_in, d_out), dtype=jnp.float32)
    b = 0.01 * jax.random.normal(kg(), (d_out,), dtype=jnp.float32)
    return w, b


def _init_mha(kg, d_model):
    wq, bq = _init_linear(kg, d_model, d_model)
    wk, bk = _init_linear(kg, d_model, d_model)
    wv, bv = _init_linear(kg, d_model, d_model)
    wo, bo = _init_linear(kg, d_model, d_model)
    return dict(wq=wq, bq=bq, wk=wk, bk=bk, wv=wv, bv=bv, wo=wo, bo=bo)


def _init_ffn(kg, d_model, hidden):
    w1, b1 = _init_linear(kg, d_model, hidden)
    w2, b2 = _init_linear(kg, hidden, d_model)
    return dict(w1=w1, b1=b1, w2=w2, b2=b2)


def init_params(key, *, enc_voc, dec_voc, d_model, ffn_hidden, n_layers, max_len):
    state = [key]

    def kg():
        state[0], sub = jax.random.split(state[0])
        return sub

    params = dict(
        enc_emb=jax.random.normal(kg(), (enc_voc, d_model), dtype=jnp.float32),
        dec_emb=jax.random.normal(kg(), (dec_voc, d_model), dtype=jnp.float32),
        enc_pe=make_sinusoid_encoding(max_len, d_model),
        dec_pe=make_sinusoid_encoding(max_len, d_model),
        enc_layers=[dict(attn=_init_mha(kg, d_model),
                         ffn=_init_ffn(kg, d_model, ffn_hidden))
                    for _ in range(n_layers)],
        dec_layers=[dict(self_attn=_init_mha(kg, d_model),
                         cross_attn=_init_mha(kg, d_model),
                         ffn=_init_ffn(kg, d_model, ffn_hidden))
                    for _ in range(n_layers)],
    )
    w_out, b_out = _init_linear(kg, d_model, dec_voc)
    params["w_out"] = w_out
    params["b_out"] = b_out
    return params


# ---------------------------------------------------------------------------
# Pure-JAX reference (mirrors the PyTorch module semantics, eval mode)
# ---------------------------------------------------------------------------

_HI = jax.lax.Precision.HIGHEST


def _mm(a, b):
    return jnp.matmul(a, b, precision=_HI)


def ref_layer_norm(x, eps=1e-12):
    mean = x.mean(-1, keepdims=True)
    var = ((x - mean) ** 2).mean(-1, keepdims=True)
    return (x - mean) / jnp.sqrt(var + eps)


def ref_embedding(ids, table, encoding):
    S = ids.shape[1]
    return table[ids] + encoding[:S][None]


def ref_mha(p, q_in, k_in, v_in, mask, n_heads, d_k):
    B, Sq, D = q_in.shape
    Sk = k_in.shape[1]
    dh = D // n_heads
    q = (_mm(q_in, p["wq"]) + p["bq"]).reshape(B, Sq, n_heads, dh).transpose(0, 2, 1, 3)
    k = (_mm(k_in, p["wk"]) + p["bk"]).reshape(B, Sk, n_heads, dh).transpose(0, 2, 1, 3)
    v = (_mm(v_in, p["wv"]) + p["bv"]).reshape(B, Sk, n_heads, dh).transpose(0, 2, 1, 3)
    scores = jnp.einsum("bhqd,bhkd->bhqk", q, k, precision=_HI)
    scores = scores / math.sqrt(d_k / n_heads)
    scores = jnp.where(mask == 0, -1e9, scores)
    probs = jax.nn.softmax(scores, axis=-1)
    ctx = jnp.einsum("bhqk,bhkd->bhqd", probs, v, precision=_HI)
    ctx = ctx.transpose(0, 2, 1, 3).reshape(B, Sq, D)
    return _mm(ctx, p["wo"]) + p["bo"]


def ref_ffn(p, x):
    h = jnp.maximum(_mm(x, p["w1"]) + p["b1"], 0.0)
    return _mm(h, p["w2"]) + p["b2"]


def ref_encoder_layer(p, x, src_mask, n_heads, d_k):
    _x = x
    x = ref_mha(p["attn"], x, x, x, src_mask, n_heads, d_k)
    x = ref_layer_norm(x + _x)
    _x = x
    x = ref_ffn(p["ffn"], x)
    x = ref_layer_norm(x + _x)
    return x


def ref_decoder_layer(p, dec, enc, trg_mask, src_mask, n_heads, d_k):
    _x = dec
    x = ref_mha(p["self_attn"], dec, dec, dec, trg_mask, n_heads, d_k)
    x = ref_layer_norm(x + _x)
    _x = x
    x = ref_mha(p["cross_attn"], x, enc, enc, src_mask, n_heads, d_k)
    x = ref_layer_norm(x + _x)
    _x = x
    x = ref_ffn(p["ffn"], x)
    x = ref_layer_norm(x + _x)
    return x


def ref_forward(params, src, trg, *, src_pad_idx, trg_pad_idx, n_heads, d_k):
    src_mask = make_src_mask(src, src_pad_idx)
    trg_mask = make_trg_mask(trg, trg_pad_idx)
    x = ref_embedding(src, params["enc_emb"], params["enc_pe"])
    for lp in params["enc_layers"]:
        x = ref_encoder_layer(lp, x, src_mask, n_heads, d_k)
    y = ref_embedding(trg, params["dec_emb"], params["dec_pe"])
    for lp in params["dec_layers"]:
        y = ref_decoder_layer(lp, y, x, trg_mask, src_mask, n_heads, d_k)
    return _mm(y, params["w_out"]) + params["b_out"]


# ---------------------------------------------------------------------------
# Demo / self-check
# ---------------------------------------------------------------------------

if __name__ == "__main__":
    ENC_VOC, DEC_VOC = 50, 60
    D_MODEL, D_K, N_HEAD = 32, 32, 4
    FFN_HIDDEN, N_LAYERS = 64, 2
    MAX_LEN = 16
    BATCH, SRC_LEN, TRG_LEN = 2, 8, 8
    SRC_PAD_IDX, TRG_PAD_IDX, TRG_SOS_IDX = 0, 0, 1  # sos idx unused in forward

    root = jax.random.PRNGKey(0)
    k_params, k_src, k_trg = jax.random.split(root, 3)

    params = init_params(k_params, enc_voc=ENC_VOC, dec_voc=DEC_VOC,
                         d_model=D_MODEL, ffn_hidden=FFN_HIDDEN,
                         n_layers=N_LAYERS, max_len=MAX_LEN)

    src = jax.random.randint(k_src, (BATCH, SRC_LEN), 1, ENC_VOC, dtype=jnp.int32)
    trg = jax.random.randint(k_trg, (BATCH, TRG_LEN), 1, DEC_VOC, dtype=jnp.int32)
    # add some padding tokens so the masks are exercised
    src = src.at[0, 6:].set(SRC_PAD_IDX)
    trg = trg.at[1, 5:].set(TRG_PAD_IDX)

    # sanity-check the embedding gather kernel on its own
    emb = transformer_embedding(src, params["enc_emb"], params["enc_pe"])
    emb_ref = ref_embedding(src, params["enc_emb"], params["enc_pe"])
    assert jnp.allclose(emb, emb_ref, atol=1e-5, rtol=1e-5)

    fwd = jax.jit(functools.partial(
        transformer_forward, src_pad_idx=SRC_PAD_IDX, trg_pad_idx=TRG_PAD_IDX,
        n_heads=N_HEAD, d_k=D_K))
    out = jax.block_until_ready(fwd(params, src, trg))

    ref = ref_forward(params, src, trg, src_pad_idx=SRC_PAD_IDX,
                      trg_pad_idx=TRG_PAD_IDX, n_heads=N_HEAD, d_k=D_K)

    assert out.shape == (BATCH, TRG_LEN, DEC_VOC)
    max_err = float(jnp.max(jnp.abs(out - ref)))
    assert jnp.allclose(out, ref, atol=2e-3, rtol=2e-3), max_err

    print("KERNEL_OK")
</pallas_src>

<mosaic_0001>
module attributes {stable_mosaic.version = 11 : i64} {
  func.func @_embedding_kernel(%arg0: i32, %arg1: i32, %arg2: memref<1x8x1xi32, #tpu.memory_space<vmem>>, %arg3: memref<50x32xf32, #tpu.memory_space<vmem>>, %arg4: memref<8x32xf32, #tpu.memory_space<vmem>>, %arg5: memref<1x8x32xf32, #tpu.memory_space<vmem>>) attributes {dimension_semantics = [#tpu.dimension_semantics<parallel>, #tpu.dimension_semantics<parallel>], iteration_bounds = array<i64: 1, 2>, scalar_prefetch = 0 : i64, scratch_operands = 0 : i64, tpu.core_type = #tpu.core_type<tc>, window_params = [{transform_indices = @transform_0, window_bounds = array<i64: 1, 8, 1>}, {pipeline_mode = #tpu.pipeline_mode<synchronous>, transform_indices = @transform_1, window_bounds = array<i64: 50, 32>}, {transform_indices = @transform_2, window_bounds = array<i64: 8, 32>}, {transform_indices = @transform_3, window_bounds = array<i64: 1, 8, 32>}]} {
    %c0 = arith.constant 0 : index
    %c0_0 = arith.constant 0 : index
    %c0_1 = arith.constant 0 : index
    %0 = vector.load %arg2[%c0, %c0_0, %c0_1] : memref<1x8x1xi32, #tpu.memory_space<vmem>>, vector<1x8x1xi32>
    %1 = vector.shape_cast %0 : vector<1x8x1xi32> to vector<8x1xi32>
    %2 = tpu.iota {dimensions = array<i32: 1>} : vector<8x50xi32>
    %3 = vector.broadcast %1 : vector<8x1xi32> to vector<8x50xi32>
    %4 = arith.cmpi eq, %2, %3 : vector<8x50xi32>
    %5 = arith.extui %4 : vector<8x50xi1> to vector<8x50xi32>
    %6 = arith.sitofp %5 : vector<8x50xi32> to vector<8x50xf32>
    %c0_2 = arith.constant 0 : index
    %c0_3 = arith.constant 0 : index
    %7 = vector.load %arg3[%c0_2, %c0_3] : memref<50x32xf32, #tpu.memory_space<vmem>>, vector<50x32xf32>
    %cst = arith.constant dense<0.000000e+00> : vector<8x32xf32>
    %8 = tpu.matmul %6, %7, %cst {dimension_numbers = #tpu.dot_dimension_numbers<[1], [0], [0], [1], [0, 0, 1, 1], [], []>} : vector<8x50xf32>, vector<50x32xf32>, vector<8x32xf32> -> vector<8x32xf32>
    %c0_4 = arith.constant 0 : index
    %c0_5 = arith.constant 0 : index
    %9 = vector.load %arg4[%c0_4, %c0_5] : memref<8x32xf32, #tpu.memory_space<vmem>>, vector<8x32xf32>
    %10 = arith.addf %8, %9 : vector<8x32xf32>
    %c0_6 = arith.constant 0 : index
    %c0_7 = arith.constant 0 : index
    %c0_8 = arith.constant 0 : index
    %11 = vector.load %arg5[%c0_6, %c0_7, %c0_8] : memref<1x8x32xf32, #tpu.memory_space<vmem>>, vector<1x8x32xf32>
    %12 = vector.shape_cast %11 : vector<1x8x32xf32> to vector<8x32xf32>
    %13 = vector.shape_cast %10 : vector<8x32xf32> to vector<1x8x32xf32>
    tpu.vector_store %arg5[%c0_6, %c0_7, %c0_8], %13 {strides = array<i32>} : memref<1x8x32xf32, #tpu.memory_space<vmem>>, vector<1x8x32xf32>,
    return
  }
  func.func @transform_0(%arg0: i32, %arg1: i32) -> (i32, i32, i32) {
    %c0_i32 = arith.constant 0 : i32
    %c0_i32_0 = arith.constant 0 : i32
    return %arg1, %arg0, %c0_i32 : i32, i32, i32
  }
  func.func @transform_1(%arg0: i32, %arg1: i32) -> (i32, i32) {
    %c0_i32 = arith.constant 0 : i32
    %c0_i32_0 = arith.constant 0 : i32
    %c0_i32_1 = arith.constant 0 : i32
    return %c0_i32, %c0_i32_0 : i32, i32
  }
  func.func @transform_2(%arg0: i32, %arg1: i32) -> (i32, i32) {
    %c0_i32 = arith.constant 0 : i32
    %c0_i32_0 = arith.constant 0 : i32
    return %arg0, %c0_i32 : i32, i32
  }
  func.func @transform_3(%arg0: i32, %arg1: i32) -> (i32, i32, i32) {
    %c0_i32 = arith.constant 0 : i32
    %c0_i32_0 = arith.constant 0 : i32
    return %arg1, %arg0, %c0_i32 : i32, i32, i32
  }
}

</mosaic_0001>

<llo_original>
// kernel: tpu_custom_call.1
$region0: #{tpu_custom_call.1}
  #allocation0 [shape = 'u32[]', space=smem, size = 0x4, offset = 0x4, fixed_abs, tag = 'smem constant byte address 0x4 - core index']
  #allocation1 [shape = 'u32[144,128]{1,0:T(1,128)}', space=vmem, size = 0x12000, scoped, tag = 'internal scratch']
  %s0 = inlined_call_operand.vmem [shape: s32[2,8,1], index: 0, kind: input, shape index: {}]
  %s1 = inlined_call_operand.vmem [shape: f32[50,32], index: 1, kind: input, shape index: {}]
  %s2 = inlined_call_operand.vmem [shape: f32[8,32], index: 2, kind: input, shape index: {}]
  %s3 = inlined_call_operand.hbm [shape: f32[2,8,32], index: 3, kind: output, shape index: {}]
  %s4 = sld [smem:[#allocation0]]
  $region45: #{tpu_custom_call.1} parent=0
    _
  %s6 = ssub.s32 1, %s4
  %s7 = scalar_select 0, %s6, %s4
  $region1: #{tpu_custom_call.1} parent=0
    #allocation2 [shape = 'u8[8192]{0}', space=vmem, size = 0x2000, scoped, tag = 'output window, operand 0']
    #allocation3 [shape = 's32[2]{0}', space=sflag, size = 0x8, scoped, tag = 'scoped memory for tpu_custom_call.1']
    %8 = vsyncpa [#allocation3], 0
    %s9 = scalar_lea.sflag [#allocation3], 1
    %10 = vsyncpa %s9, 0
    loop: start=0, step=1, limit=4
    $region2: #{tpu_custom_call.1} parent=1 // loop_pre_header
      _
    $region3: #{tpu_custom_call.1} parent=1 // loop_header
      %s12 = sphi 0, %s16
      %p13 = scmp.ge.s32.totalorder %s12, 4
      %s19 = sphi 0, %s31
      %s20 = sphi 0, %s27
      %s21 = sphi 0, %s19
      %s22 = sphi 0, %s20
      %s23 = sphi 0, %s21
      %s24 = sphi 0, %s22
      %s36 = sphi 0, %s38
      %s39 = sphi 0, %s36
      %s40 = sphi 0, %s39
      %s56 = sphi 0, %s40
      %s60 = sphi 0, %s60
      %s62 = sphi 0, %s60
      %s63 = sphi 0, %s62
      %s77 = sphi 0, %s63
      %s83 = sphi 0, %s85
      %s86 = sphi 0, %s83
      %s87 = sphi 0, %s86
      %s103 = sphi 0, %s87
      %s111 = sphi 0, %s113
      %s114 = sphi 0, %s111
      %s115 = sphi 0, %s114
      %s131 = sphi 0, %s115
    $region4: #{tpu_custom_call.1} parent=1 // loop_header_branch
      %15 = sbr.rel (%p13) target = $region8
    $region5: #{tpu_custom_call.1} parent=1 // loop_body
      %s17 = ssub.s32 %s12, 1
      %s18 = ssub.s32 %s12, 2
      %s25 = sadd.s32 1, %s20
      %p26 = scmp.ge.s32.totalorder %s25, 2
      %s27 = scalar_select %p26, 0, %s25
      %s28 = sadd.s32 1, %s19
      %s29 = scalar_select %p26, %s28, %s19
      %p30 = scmp.ge.s32.totalorder %s29, 1
      %s31 = scalar_select %p30, 0, %s29
      %s32 = ssub.s32 %s20, %s27
      %s33 = ssub.s32 %s19, %s31
      %s34 = sor.u32 %s32, %s33
      %p35 = scmp.eq.s32.totalorder %s34, 0
      %s37 = sadd.s32 %s36, 1
      %s38 = scalar_select %p35, %s36, %s37
      %p41 = pneg %p35
      %p42 = scmp.eq.s32.totalorder %s12, 1
      %p43 = por %p41, %p42
      %p44 = scmp.ne.s32.totalorder %s36, %s39
      %p45 = scmp.eq.s32.totalorder %s12, 0
      %p46 = por %p44, %p45
      %p47 = scmp.ne.s32.totalorder %s36, %s39
      %p48 = scmp.eq.s32.totalorder %s17, 1
      %p49 = por %p47, %p48
      %p50 = scmp.ne.s32.totalorder %s39, %s40
      %p51 = scmp.eq.s32.totalorder %s17, 0
      %p52 = por %p50, %p51
      %p53 = scmp.ne.s32.totalorder %s39, %s40
      %p54 = scmp.eq.s32.totalorder %s18, 1
      %p55 = por %p53, %p54
      %p57 = scmp.ne.s32.totalorder %s40, %s56
      %p58 = scmp.eq.s32.totalorder %s18, 0
      %p59 = por %p57, %p58
      %s61 = sadd.s32 %s60, 1
      %p64 = scmp.eq.s32.totalorder %s12, 1
      %p65 = scmp.ne.s32.totalorder %s60, %s62
      %p66 = scmp.eq.s32.totalorder %s12, 0
      %p67 = por %p65, %p66
      %p68 = scmp.ne.s32.totalorder %s60, %s62
      %p69 = scmp.eq.s32.totalorder %s17, 1
      %p70 = por %p68, %p69
      %p71 = scmp.ne.s32.totalorder %s62, %s63
      %p72 = scmp.eq.s32.totalorder %s17, 0
      %p73 = por %p71, %p72
      %p74 = scmp.ne.s32.totalorder %s62, %s63
      %p75 = scmp.eq.s32.totalorder %s18, 1
      %p76 = por %p74, %p75
      %p78 = scmp.ne.s32.totalorder %s63, %s77
      %p79 = scmp.eq.s32.totalorder %s18, 0
      %p80 = por %p78, %p79
      %s81 = ssub.s32 %s19, %s31
      %p82 = scmp.eq.s32.totalorder %s81, 0
      %s84 = sadd.s32 %s83, 1
      %s85 = scalar_select %p82, %s83, %s84
      %p88 = pneg %p82
      %p89 = scmp.eq.s32.totalorder %s12, 1
      %p90 = por %p88, %p89
      %p91 = scmp.ne.s32.totalorder %s83, %s86
      %p92 = scmp.eq.s32.totalorder %s12, 0
      %p93 = por %p91, %p92
      %p94 = scmp.ne.s32.totalorder %s83, %s86
      %p95 = scmp.eq.s32.totalorder %s17, 1
      %p96 = por %p94, %p95
      %p97 = scmp.ne.s32.totalorder %s86, %s87
      %p98 = scmp.eq.s32.totalorder %s17, 0
      %p99 = por %p97, %p98
      %p100 = scmp.ne.s32.totalorder %s86, %s87
      %p101 = scmp.eq.s32.totalorder %s18, 1
      %p102 = por %p100, %p101
      %p104 = scmp.ne.s32.totalorder %s87, %s103
      %p105 = scmp.eq.s32.totalorder %s18, 0
      %p106 = por %p104, %p105
      %s107 = ssub.s32 %s20, %s27
      %s108 = ssub.s32 %s19, %s31
      %s109 = sor.u32 %s107, %s108
      %p110 = scmp.eq.s32.totalorder %s109, 0
      %s112 = sadd.s32 %s111, 1
      %s113 = scalar_select %p110, %s111, %s112
      %p116 = pneg %p110
      %p117 = scmp.eq.s32.totalorder %s12, 1
      %p118 = por %p116, %p117
      %p119 = scmp.ne.s32.totalorder %s111, %s114
      %p120 = scmp.eq.s32.totalorder %s12, 0
      %p121 = por %p119, %p120
      %p122 = scmp.ne.s32.totalorder %s111, %s114
      %p123 = scmp.eq.s32.totalorder %s17, 1
      %p124 = por %p122, %p123
      %p125 = scmp.ne.s32.totalorder %s114, %s115
      %p126 = scmp.eq.s32.totalorder %s17, 0
      %p127 = por %p125, %p126
      %p128 = scmp.ne.s32.totalorder %s114, %s115
      %p129 = scmp.eq.s32.totalorder %s18, 1
      %p130 = por %p128, %p129
      %p132 = scmp.ne.s32.totalorder %s115, %s131
      %p133 = scmp.eq.s32.totalorder %s18, 0
      %p134 = por %p132, %p133
      %p135 = scmp.le.s32.totalorder 1, %s12
      %p136 = scmp.lt.s32.totalorder %s12, 3
      %p137 = pnand %p135, %p136
      %p138 = pneg %p137
      // Predicated region
      $region9: #{tpu_custom_call.1} parent=5 // pred_check
        _
      $region10: #{tpu_custom_call.1} parent=5 // pred_check_branch
        %140 = sbr.rel (%p137) target = $region12
      $region11: #{tpu_custom_call.1} parent=5 // pred_region
        %s141 = ssub.s32 %s12, 1
        // Predicated region
        $region13: #{tpu_custom_call.1} parent=11 // pred_check
          %p142 = pneg %p73
        $region14: #{tpu_custom_call.1} parent=11 // pred_check_branch
          %144 = sbr.rel (%p142) target = $region16
        $region15: #{tpu_custom_call.1} parent=11 // pred_region
          _
        $region16: #{tpu_custom_call.1} parent=11 // pred_fallthru
          _
        // Predicated region
        $region17: #{tpu_custom_call.1} parent=11 // pred_check
          %p145 = pneg %p99
        $region18: #{tpu_custom_call.1} parent=11 // pred_check_branch
          %147 = sbr.rel (%p145) target = $region20
        $region19: #{tpu_custom_call.1} parent=11 // pred_region
          %p148 = scmp.lt.s32.totalorder %s21, 0
          %s149 = scalar_select %p148, %s21, 0
          %s150 = smul.addr %s149, 8
          %s151 = scalar_lea.vmem %s2, %s150
        $region20: #{tpu_custom_call.1} parent=11 // pred_fallthru
          _
      $region12: #{tpu_custom_call.1} parent=5 // pred_fallthru
        _
      %p152 = scmp.lt.s32.totalorder %s12, 2
      // Predicated region
      $region21: #{tpu_custom_call.1} parent=5 // pred_check
        %p153 = pneg %p152
      $region22: #{tpu_custom_call.1} parent=5 // pred_check_branch
        %155 = sbr.rel (%p153) target = $region24
      $region23: #{tpu_custom_call.1} parent=5 // pred_region
        // Predicated region
        $region25: #{tpu_custom_call.1} parent=23 // pred_check
          %p156 = pneg %p46
        $region26: #{tpu_custom_call.1} parent=23 // pred_check_branch
          %158 = sbr.rel (%p156) target = $region28
        $region27: #{tpu_custom_call.1} parent=23 // pred_region
          %p159 = scmp.lt.s32.totalorder %s20, 1
          %s160 = scalar_select %p159, %s20, 1
          %p161 = scmp.lt.s32.totalorder %s19, 0
          %s162 = scalar_select %p161, %s19, 0
          %s163 = sadd.s32 %s162, %s160
          %s164 = smul.addr %s163, 8
          %s165 = scalar_lea.vmem %s0, %s164
        $region28: #{tpu_custom_call.1} parent=23 // pred_fallthru
          _
      $region24: #{tpu_custom_call.1} parent=5 // pred_fallthru
        _
      %p166 = scmp.le.s32.totalorder 1, %s12
      %p167 = scmp.lt.s32.totalorder %s12, 3
      %p168 = pnand %p166, %p167
      %p169 = pneg %p168
      // Predicated region
      $region29: #{tpu_custom_call.1} parent=5 // pred_check
        _
      $region30: #{tpu_custom_call.1} parent=5 // pred_check_branch
        %171 = sbr.rel (%p168) target = $region32
      $region31: #{tpu_custom_call.1} parent=5 // pred_region
        %s172 = ssub.s32 %s12, 1
        %p173 = scmp.lt.s32.totalorder %s22, 1
        %s174 = scalar_select %p173, %s22, 1
        %p175 = scmp.lt.s32.totalorder %s21, 0
        %s176 = scalar_select %p175, %s21, 0
        %s177 = sadd.s32 %s176, %s174
        %s178 = smul.addr %s177, 8
        %s179 = scalar_lea.vmem %s0, %s178
        %p180 = pneg %p52
        %p181 = pneg %p49
        %p182 = pneg %p73
        %p183 = pneg %p70
        %p184 = scmp.lt.s32.totalorder %s21, 0
        %s185 = scalar_select %p184, %s21, 0
        %s186 = smul.addr %s185, 8
        %s187 = scalar_lea.vmem %s2, %s186
        %p188 = pneg %p99
        %p189 = pneg %p96
        %p190 = pneg %p127
        %p191 = pneg %p124
        %s192 = sand.u32 %s114, 1
        %s193 = scalar_lea.sflag [#allocation3], %s192
        %s194 = sand.u32 %s114, 1
        %s195 = smul.addr %s194, 8
        %s196 = scalar_lea.vmem [#allocation2], %s195
        %p197 = scmp.lt.s32.totalorder %s22, 1
        %s198 = scalar_select %p197, %s22, 1
        %p199 = scmp.lt.s32.totalorder %s21, 0
        %s200 = scalar_select %p199, %s21, 0
        %s201 = sadd.s32 %s200, %s198
        %s202 = smul.addr %s201, 8
        %s203 = scalar_lea.vmem %s0, %s202
        %p204 = scmp.lt.s32.totalorder %s21, 0
        %s205 = scalar_select %p204, %s21, 0
        %s206 = smul.addr %s205, 8
        %s207 = scalar_lea.vmem %s2, %s206
        %v208 = vld [vmem:[%s203] sm:$0xff]
        %v209 = vlaneseq
        %v210 = vand.u32 %v209, 127
        %211 = vset.pattern.permute.xlu0 0
        %212 = vperm.xlu0 %211, %v208
        %v213 = vpop.permute.xlu0 %212
        %vm214 = vcmp.eq.s32.totalorder %v210, %v213
        %v215 = vsel %vm214, 1, 0
        %v216 = vcvt.s32.f32 %v215
        %v217 = vld [vmem:[%s1] sm:$0xff]
        %v218 = vld [vmem:[%s1 + $0x8] sm:$0xff]
        %v219 = vld [vmem:[%s1 + $0x10] sm:$0xff]
        %v220 = vld [vmem:[%s1 + $0x18] sm:$0xff]
        %v221 = vld [vmem:[%s1 + $0x20] sm:$0xff]
        %v222 = vld [vmem:[%s1 + $0x28] sm:$0xff]
        %v223 = vld [vmem:[%s1 + $0x30] sm:$0x3]
        %v224 = vld [vmem:[%s207] sm:$0xff]
        %vm225 = vcmask 408576
        %v227 = vsel %vm225, %v216, 0
        %vm229 = vcmask 1041408
        %v231 = vsel %vm229, %v223, 0
        %233 = vmatprep.subr.mxu0 0.0
        %234 = vmatpush1.msra.mxu0 %v217
        %235 = vmatprep.subr.mxu0 0.0
        %236 = vmatpush1.msra.mxu0 %v218
        %237 = vmatprep.subr.mxu0 0.0
        %238 = vmatpush1.msra.mxu0 %v219
        %239 = vmatprep.subr.mxu0 0.0
        %240 = vmatpush1.msra.mxu0 %v220
        %241 = vmatprep.subr.mxu0 0.0
        %242 = vmatpush1.msra.mxu0 %v221
        %243 = vmatprep.subr.mxu0 0.0
        %244 = vmatpush1.msra.mxu0 %v222
        %245 = vmatprep.subr.mxu0 0.0
        %246 = vmatpush1.msra.mxu0 %v231
        %247 = vmatprep.subr.mxu0 0.0
        %248 = vmatpush1.msra.mxu0 0.0
        %249 = vmatprep.subr.mxu0 0.0
        %250 = vmatpush1.msra.mxu0 0.0
        %251 = vmatprep.subr.mxu0 0.0
        %252 = vmatpush1.msra.mxu0 0.0
        %253 = vmatprep.subr.mxu0 0.0
        %254 = vmatpush1.msra.mxu0 0.0
        %255 = vmatprep.subr.mxu0 0.0
        %256 = vmatpush1.msra.mxu0 0.0
        %257 = vmatprep.subr.mxu0 0.0
        %258 = vmatpush1.msra.mxu0 0.0
        %259 = vmatprep.subr.mxu0 0.0
        %260 = vmatpush1.msra.mxu0 0.0
        %261 = vmatprep.subr.mxu0 0.0
        %262 = vmatpush1.msra.mxu0 0.0
        %263 = vmatprep.subr.mxu0 0.0
        %264 = vmatpush1.msra.mxu0 0.0
        %265 = vmatprep.subr.mxu0 0.0
        %266 = vmatpush1.msra.mxu0 0.0
        %267 = vmatprep.subr.mxu0 0.0
        %268 = vmatpush1.msra.mxu0 0.0
        %269 = vmatprep.subr.mxu0 0.0
        %270 = vmatpush1.msra.mxu0 0.0
        %271 = vmatprep.subr.mxu0 0.0
        %272 = vmatpush1.msra.mxu0 0.0
        %273 = vmatprep.subr.mxu0 0.0
        %274 = vmatpush1.msra.mxu0 0.0
        %275 = vmatprep.subr.mxu0 0.0
        %276 = vmatpush1.msra.mxu0 0.0
        %277 = vmatprep.subr.mxu0 0.0
        %278 = vmatpush1.msra.mxu0 0.0
        %279 = vmatprep.subr.mxu0 0.0
        %280 = vmatpush1.msra.mxu0 0.0
        %281 = vmatprep.subr.mxu0 0.0
        %282 = vmatpush1.msra.mxu0 0.0
        %283 = vmatprep.subr.mxu0 0.0
        %284 = vmatpush1.msra.mxu0 0.0
        %285 = vmatprep.subr.mxu0 0.0
        %286 = vmatpush1.msra.mxu0 0.0
        %287 = vmatprep.subr.mxu0 0.0
        %288 = vmatpush1.msra.mxu0 0.0
        %289 = vmatprep.subr.mxu0 0.0
        %290 = vmatpush1.msra.mxu0 0.0
        %291 = vmatprep.subr.mxu0 0.0
        %292 = vmatpush1.msra.mxu0 0.0
        %293 = vmatprep.subr.mxu0 0.0
        %294 = vmatpush1.msra.mxu0 0.0
        %295 = vmatprep.subr.mxu0 0.0
        %296 = vmatpush1.msra.mxu0 0.0
        %297 = vmatprep.mubr.f32.mxu0 0.0
        %298 = vmatmul.mubr.f32.gmra.mrb[0].mxu0 %v227
        %v299 = vpop.f32.mrb[0].mxu0
        %v300 = vadd.f32 %v224, %v299
        %v301 = vpop.f32.mrb[0].mxu0
        %302 = vdwg.mxu0
        %vm303 = vcmask 261120
        %304 = vst.msk [vmem:[%s196] sm:$0xff] %vm303, %v300
        %s305 = sand.u32 %s114, 1
        %s306 = scalar_lea.sflag [#allocation3], %s305
        %s307 = sand.u32 %s114, 1
        %s308 = smul.addr %s307, 8
        %s309 = scalar_lea.vmem [#allocation2], %s308
        // Predicated region
        $region33: #{tpu_custom_call.1} parent=31 // pred_check
          %p310 = pneg %p124
        $region34: #{tpu_custom_call.1} parent=31 // pred_check_branch
          %312 = sbr.rel (%p310) target = $region36
        $region35: #{tpu_custom_call.1} parent=31 // pred_region
          %s314 = ssub.s32 128, 128
          %315 = vsyncadd %s306, %s314
          %s316 = sadd.s32 %s21, %s22
          %s317 = smul.addr %s316, 128
          %s318 = scalar_lea.hbm %s3, %s317
          %s320 = sshll.u32 %s309, 4
          %s321 = int_to_ptr.vmem [resolvable:$true] %s320
          %323 = dma.vmem_to_hbm [thread:$0]  %s321, 128, %s318, %s306
        $region36: #{tpu_custom_call.1} parent=31 // pred_fallthru
          _
      $region32: #{tpu_custom_call.1} parent=5 // pred_fallthru
        _
      %p324 = scmp.le.s32.totalorder 2, %s12
      // Predicated region
      $region37: #{tpu_custom_call.1} parent=5 // pred_check
        %p325 = pneg %p324
      $region38: #{tpu_custom_call.1} parent=5 // pred_check_branch
        %327 = sbr.rel (%p325) target = $region40
      $region39: #{tpu_custom_call.1} parent=5 // pred_region
        %s328 = ssub.s32 %s12, 2
        // Predicated region
        $region41: #{tpu_custom_call.1} parent=39 // pred_check
          %p329 = pneg %p130
        $region42: #{tpu_custom_call.1} parent=39 // pred_check_branch
          %331 = sbr.rel (%p329) target = $region44
        $region43: #{tpu_custom_call.1} parent=39 // pred_region
          %s332 = sand.u32 %s115, 1
          %s333 = scalar_lea.sflag [#allocation3], %s332
          %s334 = sand.u32 %s115, 1
          %s335 = smul.addr %s334, 8
          %s336 = scalar_lea.vmem [#allocation2], %s335
          %337 = dma.done %s333, 128
        $region44: #{tpu_custom_call.1} parent=39 // pred_fallthru
          _
      $region40: #{tpu_custom_call.1} parent=5 // pred_fallthru
        _
    $region6: #{tpu_custom_call.1} parent=1 // loop_footer
      %s16 = sadd.s32 1, %s12
    $region7: #{tpu_custom_call.1} parent=1 // loop_footer_branch
      %11 = sbr.rel target = $region3
    $region8: #{tpu_custom_call.1} parent=1 // loop_exit
      _
    %338 = vsyncpa [#allocation3], 1
    %s339 = scalar_lea.sflag [#allocation3], 1
    %340 = vsyncpa %s339, 1

</llo_original>
